<compile_context>
chip_gen: v6e
topology: v6e:2x2x1
jax: 0.10.0
libtpu: 0.0.40
codegen_flags: <defaults>
</compile_context>

<pallas_src>
import functools

import jax
import jax.numpy as jnp
from jax.experimental import pallas as pl
from jax.experimental.pallas import tpu as pltpu

_LANE = 128      # lane width: feature dims padded to multiples of this
_SUBLANE = 16    # bf16 row-tile granularity


# ----------------------------- kernels ------------------------------------ #

def _mlp1_kernel(x_ref, w1_ref, b1_ref, o_ref):
    # num_layer == 1 :  out = x @ W1 + b1
    y = jnp.dot(x_ref[...], w1_ref[...],
                preferred_element_type=jnp.float32) + b1_ref[...]
    o_ref[...] = y.astype(o_ref.dtype)


def _mlp2_kernel(x_ref, w1_ref, b1_ref, w2_ref, b2_ref, o_ref):
    # num_layer == 2 :  out = relu(x @ W1 + b1) @ W2 + b2   (dropout = identity)
    h = jnp.dot(x_ref[...], w1_ref[...],
                preferred_element_type=jnp.float32) + b1_ref[...]
    h = jnp.maximum(h, 0.0).astype(w2_ref.dtype)
    y = jnp.dot(h, w2_ref[...], preferred_element_type=jnp.float32) + b2_ref[...]
    o_ref[...] = y.astype(o_ref.dtype)


def _mlp3_kernel(x_ref, w1_ref, b1_ref, w2_ref, b2_ref, w3_ref, b3_ref,
                 wr_ref, br_ref, o_ref):
    # num_layer >= 3 :
    #   h1  = relu(x @ W1 + b1)
    #   h2  = relu(h1 @ W2 + b2)
    #   out = relu((h2 @ W3 + b3) + (x @ Wr + br))
    x = x_ref[...]
    h = jnp.dot(x, w1_ref[...], preferred_element_type=jnp.float32) + b1_ref[...]
    h = jnp.maximum(h, 0.0).astype(w2_ref.dtype)
    h = jnp.dot(h, w2_ref[...], preferred_element_type=jnp.float32) + b2_ref[...]
    h = jnp.maximum(h, 0.0).astype(w3_ref.dtype)
    y = jnp.dot(h, w3_ref[...], preferred_element_type=jnp.float32) + b3_ref[...]
    r = jnp.dot(x, wr_ref[...], preferred_element_type=jnp.float32) + br_ref[...]
    o_ref[...] = jnp.maximum(y + r, 0.0).astype(o_ref.dtype)


# ----------------------------- helpers ------------------------------------ #

def _round_up(v, m):
    return (v + m - 1) // m * m


def _vmem_capacity_bytes():
    try:
        return int(pltpu.get_tpu_info().vmem_capacity_bytes)
    except Exception:
        return 64 * 1024 * 1024   # conservative default (v7x per-TC VMEM)


def prepare_params(params):
    """Zero-pad every feature dim to a multiple of 128 (lane-dense) and cast
    weights to bf16 (f32 biases).  Call ONCE, outside the jitted forward."""
    out = {}
    for name, a in params.items():
        r, c = a.shape
        row_pad = _round_up(r, _LANE) - r if name.startswith("w") else 0
        col_pad = _round_up(c, _LANE) - c
        a = jnp.pad(a, ((0, row_pad), (0, col_pad)))
        out[name] = a.astype(jnp.bfloat16 if name.startswith("w") else jnp.float32)
    return out


# ----------------------------- wrapper ------------------------------------ #

@functools.partial(jax.jit, static_argnames=("num_layer", "dim_out", "tile_m"))
def mlp4proj_forward(x, params, *, num_layer, dim_out, tile_m=512):
    """Pallas implementation of MLP4Proj.forward (inference).

    x:       [..., dim_in] float32
    params:  output of prepare_params() (lane-padded; bf16 weights, f32 biases)
    dim_out: logical (unpadded) output feature count
    """
    lead_shape = x.shape[:-1]
    dim_in = x.shape[-1]

    if num_layer == 1:
        kernel = _mlp1_kernel
        wb = [params["w1"], params["b1"]]
    elif num_layer == 2:
        kernel = _mlp2_kernel
        wb = [params["w1"], params["b1"], params["w2"], params["b2"]]
    else:
        kernel = _mlp3_kernel
        wb = [params["w1"], params["b1"], params["w2"], params["b2"],
              params["w3"], params["b3"], params["wr"], params["br"]]

    k_pad = wb[0].shape[0]           # lane-padded dim_in
    n_pad = wb[-1].shape[-1]         # lane-padded dim_out

    # --- row tiling: large MXU-aligned tile, padded M, VMEM-budgeted -------
    x2 = x.reshape((-1, dim_in))
    m = x2.shape[0]
    tm = _round_up(min(int(tile_m), _round_up(m, _SUBLANE)), _SUBLANE)

    w_bytes = sum(int(a.size) * a.dtype.itemsize for a in wb)

    def vmem_est(t):
        # x tile (bf16) + out tile (f32) + weights, all double-buffered by the
        # default pallas_call pipeline.
        return 2 * (t * k_pad * 2 + t * n_pad * 4 + w_bytes)

    vmem_cap = _vmem_capacity_bytes()
    while vmem_est(tm) > (vmem_cap * 3) // 4 and tm > 64:
        tm = _round_up(tm // 2, _SUBLANE)
    vmem_limit = min((vmem_cap * 9) // 10,
                     max(32 * 1024 * 1024, 2 * vmem_est(tm)))

    m_pad = _round_up(m, tm)
    grid = (m_pad // tm,)

    # Zero-pad rows (ragged M) + feature dim (lane density); feed bf16.
    x2p = jnp.pad(x2, ((0, m_pad - m), (0, k_pad - dim_in))).astype(jnp.bfloat16)

    in_specs = [pl.BlockSpec((tm, k_pad), lambda i: (i, 0))]
    # Weights / biases: full block with a grid-invariant index_map, so the
    # pipeline only DMAs them once across all row tiles.
    in_specs += [pl.BlockSpec(a.shape, lambda i: (0, 0)) for a in wb]
    out_spec = pl.BlockSpec((tm, n_pad), lambda i: (i, 0))

    flops = 2 * m_pad * sum(int(w.shape[0]) * int(w.shape[1]) for w in wb[0::2])
    bytes_accessed = (int(x2p.size) * x2p.dtype.itemsize + w_bytes
                      + m_pad * n_pad * x.dtype.itemsize)

    out = pl.pallas_call(
        kernel,
        out_shape=jax.ShapeDtypeStruct((m_pad, n_pad), x.dtype),
        grid_spec=pltpu.PrefetchScalarGridSpec(
            num_scalar_prefetch=0,
            grid=grid,
            in_specs=in_specs,
            out_specs=out_spec,
        ),
        compiler_params=pltpu.CompilerParams(
            dimension_semantics=("parallel",),
            vmem_limit_bytes=int(vmem_limit),
        ),
        cost_estimate=pl.CostEstimate(
            flops=int(flops),
            transcendentals=0,
            bytes_accessed=int(bytes_accessed)),
    )(x2p, *wb)

    return out[:m, :dim_out].reshape(lead_shape + (dim_out,))


# --------------------- deterministic parameter init ----------------------- #

def init_params(key, num_layer, dim_in, dim_out):
    dim_middle = (dim_in + dim_out) // 2

    def linear(k, fan_in, fan_out):
        kw, kb = jax.random.split(k)
        bound = 1.0 / jnp.sqrt(fan_in)
        # stored as (in, out) so the kernel does x @ W + b
        w = jax.random.uniform(kw, (fan_in, fan_out), jnp.float32, -bound, bound)
        b = jax.random.uniform(kb, (1, fan_out), jnp.float32, -bound, bound)
        return w, b

    keys = jax.random.split(key, 4)
    params = {}
    if num_layer == 1:
        params["w1"], params["b1"] = linear(keys[0], dim_in, dim_out)
    elif num_layer == 2:
        params["w1"], params["b1"] = linear(keys[0], dim_in, dim_middle)
        params["w2"], params["b2"] = linear(keys[1], dim_middle, dim_out)
    else:
        params["w1"], params["b1"] = linear(keys[0], dim_in, dim_middle)
        params["w2"], params["b2"] = linear(keys[1], dim_middle, dim_middle)
        params["w3"], params["b3"] = linear(keys[2], dim_middle, dim_out)
        params["wr"], params["br"] = linear(keys[3], dim_in, dim_out)
    return params


# ------------------------- pure-JAX reference ------------------------------ #

def reference_forward(x, params, num_layer):
    if num_layer == 1:
        return x @ params["w1"] + params["b1"]
    if num_layer == 2:
        h = jax.nn.relu(x @ params["w1"] + params["b1"])
        return h @ params["w2"] + params["b2"]
    h = jax.nn.relu(x @ params["w1"] + params["b1"])
    h = jax.nn.relu(h @ params["w2"] + params["b2"])
    y = h @ params["w3"] + params["b3"]
    r = x @ params["wr"] + params["br"]
    return jax.nn.relu(y + r)


# --------------------------------- main ------------------------------------ #

if __name__ == "__main__":
    key = jax.random.PRNGKey(0)
    kx, kp1, kp2, kp3 = jax.random.split(key, 4)

    batch, seq = 2, 8
    dim_in, dim_out = 32, 32          # dim_middle = 32

    x = jax.random.normal(kx, (batch, seq, dim_in), jnp.float32)

    for num_layer, kp in ((1, kp1), (2, kp2), (3, kp3)):
        params = init_params(kp, num_layer, dim_in, dim_out)
        padded = prepare_params(params)                 # pad + bf16 cast, once
        out = mlp4proj_forward(x, padded, num_layer=num_layer, dim_out=dim_out)
        out = jax.block_until_ready(out)
        ref = reference_forward(x, params, num_layer)   # f32 reference
        assert out.shape == ref.shape
        # bf16 matmul inputs vs f32 reference -> loose tolerance
        assert jnp.allclose(out, ref, atol=5e-2, rtol=5e-2), (
            f"mismatch for num_layer={num_layer}")

    print("KERNEL_OK")
</pallas_src>

<mosaic_0001>
module attributes {stable_mosaic.version = 11 : i64} {
  func.func @_mlp1_kernel(%arg0: i32, %arg1: memref<16x128xbf16, #tpu.memory_space<vmem>>, %arg2: memref<128x128xbf16, #tpu.memory_space<vmem>>, %arg3: memref<1x128xf32, #tpu.memory_space<vmem>>, %arg4: memref<16x128xf32, #tpu.memory_space<vmem>>) attributes {dimension_semantics = [#tpu.dimension_semantics<parallel>], iteration_bounds = array<i64: 1>, scalar_prefetch = 0 : i64, scratch_operands = 0 : i64, tpu.core_type = #tpu.core_type<tc>, window_params = [{transform_indices = @transform_0, window_bounds = array<i64: 16, 128>}, {pipeline_mode = #tpu.pipeline_mode<synchronous>, transform_indices = @transform_1, window_bounds = array<i64: 128, 128>}, {pipeline_mode = #tpu.pipeline_mode<synchronous>, transform_indices = @transform_2, window_bounds = array<i64: 1, 128>}, {transform_indices = @transform_3, window_bounds = array<i64: 16, 128>}]} {
    %c0 = arith.constant 0 : index
    %c0_0 = arith.constant 0 : index
    %0 = vector.load %arg1[%c0, %c0_0] : memref<16x128xbf16, #tpu.memory_space<vmem>>, vector<16x128xbf16>
    %c0_1 = arith.constant 0 : index
    %c0_2 = arith.constant 0 : index
    %1 = vector.load %arg2[%c0_1, %c0_2] : memref<128x128xbf16, #tpu.memory_space<vmem>>, vector<128x128xbf16>
    %cst = arith.constant dense<0.000000e+00> : vector<16x128xf32>
    %2 = tpu.matmul %0, %1, %cst {dimension_numbers = #tpu.dot_dimension_numbers<[1], [0], [0], [1], [0, 0, 1, 1], [], []>} : vector<16x128xbf16>, vector<128x128xbf16>, vector<16x128xf32> -> vector<16x128xf32>
    %c0_3 = arith.constant 0 : index
    %c0_4 = arith.constant 0 : index
    %3 = vector.load %arg3[%c0_3, %c0_4] : memref<1x128xf32, #tpu.memory_space<vmem>>, vector<1x128xf32>
    %4 = vector.broadcast %3 : vector<1x128xf32> to vector<16x128xf32>
    %5 = arith.addf %2, %4 : vector<16x128xf32>
    %c0_5 = arith.constant 0 : index
    %c0_6 = arith.constant 0 : index
    %6 = vector.load %arg4[%c0_5, %c0_6] : memref<16x128xf32, #tpu.memory_space<vmem>>, vector<16x128xf32>
    tpu.vector_store %arg4[%c0_5, %c0_6], %5 {strides = array<i32>} : memref<16x128xf32, #tpu.memory_space<vmem>>, vector<16x128xf32>,
    return
  }
  func.func @transform_0(%arg0: i32) -> (i32, i32) {
    %c0_i32 = arith.constant 0 : i32
    %c0_i32_0 = arith.constant 0 : i32
    return %arg0, %c0_i32 : i32, i32
  }
  func.func @transform_1(%arg0: i32) -> (i32, i32) {
    %c0_i32 = arith.constant 0 : i32
    %c0_i32_0 = arith.constant 0 : i32
    %c0_i32_1 = arith.constant 0 : i32
    return %c0_i32, %c0_i32_0 : i32, i32
  }
  func.func @transform_2(%arg0: i32) -> (i32, i32) {
    %c0_i32 = arith.constant 0 : i32
    %c0_i32_0 = arith.constant 0 : i32
    %c0_i32_1 = arith.constant 0 : i32
    return %c0_i32, %c0_i32_0 : i32, i32
  }
  func.func @transform_3(%arg0: i32) -> (i32, i32) {
    %c0_i32 = arith.constant 0 : i32
    %c0_i32_0 = arith.constant 0 : i32
    return %arg0, %c0_i32 : i32, i32
  }
}

</mosaic_0001>

<llo_original>
// kernel: mlp4proj_forward.1
$region0: #{mlp4proj_forward.1}
  #allocation0 [shape = 'u32[]', space=smem, size = 0x4, offset = 0x4, fixed_abs, tag = 'smem constant byte address 0x4 - core index']
  #allocation1 [shape = 'u32[144,128]{1,0:T(1,128)}', space=vmem, size = 0x12000, scoped, tag = 'internal scratch']
  %s0 = inlined_call_operand.vmem [shape: bf16[16,128], index: 0, kind: input, shape index: {}]
  %s1 = inlined_call_operand.hbm [shape: bf16[128,128], index: 1, kind: input, shape index: {}]
  %s2 = inlined_call_operand.vmem [shape: f32[1,128], index: 2, kind: input, shape index: {}]
  %s3 = inlined_call_operand.vmem [shape: f32[16,128], index: 3, kind: output, shape index: {}]
  %s4 = sld [smem:[#allocation0]]
  $region26: #{mlp4proj_forward.1} parent=0
    _
  %s6 = ssub.s32 1, %s4
  %s7 = scalar_select 0, %s6, %s4
  $region1: #{mlp4proj_forward.1} parent=0
    #allocation2 [shape = 'u8[32768]{0}', space=vmem, size = 0x8000, scoped, tag = 'input window, operand 1, single buffered']
    #allocation3 [shape = 's32[1]{0}', space=sflag, size = 0x4, scoped, tag = 'scoped memory for mlp4proj_forward.1']
    %8 = vsyncpa [#allocation3], 0
    // Predicated region
    $region2: #{mlp4proj_forward.1} parent=1 // pred_check
      _
    $region3: #{mlp4proj_forward.1} parent=1 // pred_check_branch
      %10 = sbr.rel (0) target = $region5
    $region4: #{mlp4proj_forward.1} parent=1 // pred_region
      _
    $region5: #{mlp4proj_forward.1} parent=1 // pred_fallthru
      _
    // Predicated region
    $region6: #{mlp4proj_forward.1} parent=1 // pred_check
      _
    $region7: #{mlp4proj_forward.1} parent=1 // pred_check_branch
      %12 = sbr.rel (0) target = $region9
    $region8: #{mlp4proj_forward.1} parent=1 // pred_region
      %s14 = ssub.s32 1024, 1024
      %15 = vsyncadd [#allocation3], %s14
      %s16 = sshll.u32 [#allocation2], 4
      %s17 = int_to_ptr.vmem [resolvable:$true] %s16
      %22 = dma.hbm_to_vmem [thread:$0]  %s1, 1024, %s17, [#allocation3], 64, 64, 4
    $region9: #{mlp4proj_forward.1} parent=1 // pred_fallthru
      _
    // Predicated region
    $region10: #{mlp4proj_forward.1} parent=1 // pred_check
      _
    $region11: #{mlp4proj_forward.1} parent=1 // pred_check_branch
      %24 = sbr.rel (0) target = $region13
    $region12: #{mlp4proj_forward.1} parent=1 // pred_region
      _
    $region13: #{mlp4proj_forward.1} parent=1 // pred_fallthru
      _
    // Predicated region
    $region14: #{mlp4proj_forward.1} parent=1 // pred_check
      _
    $region15: #{mlp4proj_forward.1} parent=1 // pred_check_branch
      %26 = sbr.rel (0) target = $region17
    $region16: #{mlp4proj_forward.1} parent=1 // pred_region
      %27 = dma.done [#allocation3], 1024
    $region17: #{mlp4proj_forward.1} parent=1 // pred_fallthru
      _
    %v29 = vld [vmem:[%s0] sm:$0xf]
    %v30 = vld [vmem:[%s0 + $0x4] sm:$0xf]
    %v31 = vld [vmem:[#allocation2] sm:$0xf]
    %v32 = vld [vmem:[#allocation2 + $0x4] sm:$0xf]
    %v33 = vld [vmem:[#allocation2 + $0x8] sm:$0xf]
    %v34 = vld [vmem:[#allocation2 + $0xc] sm:$0xf]
    %v35 = vld [vmem:[#allocation2 + $0x10] sm:$0xf]
    %v36 = vld [vmem:[#allocation2 + $0x14] sm:$0xf]
    %v37 = vld [vmem:[#allocation2 + $0x18] sm:$0xf]
    %v38 = vld [vmem:[#allocation2 + $0x1c] sm:$0xf]
    %v39 = vld [vmem:[#allocation2 + $0x20] sm:$0xf]
    %v40 = vld [vmem:[#allocation2 + $0x24] sm:$0xf]
    %v41 = vld [vmem:[#allocation2 + $0x28] sm:$0xf]
    %v42 = vld [vmem:[#allocation2 + $0x2c] sm:$0xf]
    %v43 = vld [vmem:[#allocation2 + $0x30] sm:$0xf]
    %v44 = vld [vmem:[#allocation2 + $0x34] sm:$0xf]
    %v45 = vld [vmem:[#allocation2 + $0x38] sm:$0xf]
    %v46 = vld [vmem:[#allocation2 + $0x3c] sm:$0xf]
    %v47 = vld [vmem:[%s2] sm:$0x1]
    %v49 = vlaneseq
    %v50 = vshrl.u32 %v49, 7
    %v51 = vsub.s32 0, %v50
    %v52 = vrot.slane %v47, %v51
    %v56 = vunpack.c.l.b16 %v29
    %v57 = vunpack.c.l.b16 %v30
    %v58 = vpack.c.b16 %v57, %v56
    %v76 = vunpack.c.l.b16 %v31
    %v77 = vunpack.c.l.b16 %v32
    %v78 = vunpack.c.l.b16 %v33
    %v79 = vunpack.c.l.b16 %v34
    %v80 = vunpack.c.l.b16 %v35
    %v81 = vunpack.c.l.b16 %v36
    %v82 = vunpack.c.l.b16 %v37
    %v83 = vunpack.c.l.b16 %v38
    %v84 = vunpack.c.l.b16 %v39
    %v85 = vunpack.c.l.b16 %v40
    %v86 = vunpack.c.l.b16 %v41
    %v87 = vunpack.c.l.b16 %v42
    %v88 = vunpack.c.l.b16 %v43
    %v89 = vunpack.c.l.b16 %v44
    %v90 = vunpack.c.l.b16 %v45
    %v91 = vunpack.c.l.b16 %v46
    %v92 = vpack.c.b16 %v77, %v76
    %v93 = vpack.c.b16 %v79, %v78
    %v94 = vpack.c.b16 %v81, %v80
    %v95 = vpack.c.b16 %v83, %v82
    %v96 = vpack.c.b16 %v85, %v84
    %v97 = vpack.c.b16 %v87, %v86
    %v98 = vpack.c.b16 %v89, %v88
    %v99 = vpack.c.b16 %v91, %v90
    %108 = vmatprep.subr.bf16.mxu0 0
    %109 = vmatpush1.bf16.msra.mxu0 %v99
    %110 = vmatprep.subr.bf16.mxu0 0
    %111 = vmatpush1.bf16.msra.mxu0 %v98
    %112 = vmatprep.subr.bf16.mxu0 0
    %113 = vmatpush1.bf16.msra.mxu0 %v97
    %114 = vmatprep.subr.bf16.mxu0 0
    %115 = vmatpush1.bf16.msra.mxu0 %v96
    %116 = vmatprep.subr.bf16.mxu0 0
    %117 = vmatpush1.bf16.msra.mxu0 %v95
    %118 = vmatprep.subr.bf16.mxu0 0
    %119 = vmatpush1.bf16.msra.mxu0 %v94
    %120 = vmatprep.subr.bf16.mxu0 0
    %121 = vmatpush1.bf16.msra.mxu0 %v93
    %122 = vmatprep.subr.bf16.mxu0 0
    %123 = vmatpush1.bf16.msra.mxu0 %v92
    %124 = vmatprep.subr.bf16.mxu0 0
    %125 = vmatpush2.bf16.msra.mxu0 0
    %126 = vmatprep.subr.bf16.mxu0 0
    %127 = vmatpush2.bf16.msra.mxu0 0
    %128 = vmatprep.subr.bf16.mxu0 0
    %129 = vmatpush2.bf16.msra.mxu0 0
    %130 = vmatprep.subr.bf16.mxu0 0
    %131 = vmatpush2.bf16.msra.mxu0 0
    %132 = vmatprep.subr.bf16.mxu0 0
    %133 = vmatpush2.bf16.msra.mxu0 0
    %134 = vmatprep.subr.bf16.mxu0 0
    %135 = vmatpush2.bf16.msra.mxu0 0
    %136 = vmatprep.subr.bf16.mxu0 0
    %137 = vmatpush2.bf16.msra.mxu0 0
    %138 = vmatprep.subr.bf16.mxu0 0
    %139 = vmatpush2.bf16.msra.mxu0 0
    %140 = vmatprep.mubr.bf16.mxu0 0
    %141 = vmatmul.mubr.bf16.gmra.mxu0 %v58
    %v142 = vpop.f32.mrf.mxu0
    %v143 = vadd.f32 %v52, %v142
    %v144 = vpop.f32.mrf.mxu0
    %v145 = vpop.f32.mrf.mxu0
    %v146 = vadd.f32 %v52, %v145
    %v147 = vpop.f32.mrf.mxu0
    %148 = vdwg.mxu0
    %149 = vst [vmem:[%s3] sm:$0xff] %v143
    %150 = vst [vmem:[%s3 + $0x8] sm:$0xff] %v146
    // Predicated region
    $region18: #{mlp4proj_forward.1} parent=1 // pred_check
      _
    $region19: #{mlp4proj_forward.1} parent=1 // pred_check_branch
      %152 = sbr.rel (0) target = $region21
    $region20: #{mlp4proj_forward.1} parent=1 // pred_region
      _
    $region21: #{mlp4proj_forward.1} parent=1 // pred_fallthru
      _
    // Predicated region
    $region22: #{mlp4proj_forward.1} parent=1 // pred_check
      _
    $region23: #{mlp4proj_forward.1} parent=1 // pred_check_branch
      %154 = sbr.rel (0) target = $region25
    $region24: #{mlp4proj_forward.1} parent=1 // pred_region
      _
    $region25: #{mlp4proj_forward.1} parent=1 // pred_fallthru
      _
    %155 = vsyncpa [#allocation3], 1

</llo_original>
